<compile_context>
chip_gen: v7x
topology: tpu7x:2x2x1
jax: 0.10.0
libtpu: 0.0.40
codegen_flags: <defaults>
</compile_context>

<pallas_src>
import math

import jax
import jax.numpy as jnp
from jax.experimental import pallas as pl
from jax.experimental.pallas import tpu as pltpu


def fnn_kernel(x_ref, w1_ref, b1_ref, w2_ref, b2_ref, o_ref):
    x = x_ref[...]                                                   # [TB, IN]
    # Layer 1 on the MXU, f32 accumulation. (Default precision already gave
    # <1e-5 agreement with the f32 reference; pass precision=HIGHEST here if
    # bit-faithful parity with PyTorch f32 is ever required.)
    h = jnp.dot(x, w1_ref[...], preferred_element_type=jnp.float32)  # [TB, H]
    h = h + b1_ref[...]                                              # + [1, H] broadcast
    h = jnp.maximum(h, 0.01 * h)                                     # LeakyReLU(0.01), mul+max
    # Layer 2 (N == 1): VPU multiply + lane reduction instead of a 1-column
    # MXU pass that would waste almost all result lanes.
    y = jnp.sum(h * w2_ref[...], axis=-1, keepdims=True)             # [TB, 1]
    o_ref[...] = (y + b2_ref[0, 0]).astype(o_ref.dtype)              # b2 scalar from SMEM


def _round_up(x, m):
    return ((x + m - 1) // m) * m


# Below this many rows per tile, splitting the batch across two grid steps
# (for v7x's two TensorCores) costs more in per-step overhead than it gains.
_MIN_TILE = 1024


def fnn_forward(x, w1, b1, w2_row, b2, *, block_b=2048):
    """y = leaky_relu(x @ w1 + b1) @ w2_row.T + b2

    x:      [B, IN]   f32
    w1:     [IN, H]   f32   (transpose of PyTorch's [H, IN])
    b1:     [1, H]    f32
    w2_row: [1, H]    f32   (PyTorch's second-layer weight, already [out=1, in=H])
    b2:     [1, 1]    f32
    """
    B, in_size = x.shape
    hidden = w1.shape[1]
    out_size = w2_row.shape[0]  # == 1

    # ---- Tile selection -----------------------------------------------------
    # full batch rounded up to the f32 sublane multiple (8).
    block_b = max(_round_up(block_b, 8), 8)
    full = _round_up(max(B, 1), 8)
    # Number of grid steps: respect the max tile size; additionally force at
    # least 2 steps once each half is still >= _MIN_TILE rows, so the
    # "parallel" batch axis shards across both v7x TensorCores.
    n_steps = max(pl.cdiv(full, block_b), 1)
    if n_steps == 1 and full >= 2 * _MIN_TILE:
        n_steps = 2
    # Balanced tiles (ceil(full / n_steps), rounded to a sublane multiple)
    # minimise padding waste for awkward batch sizes.
    tb = _round_up(pl.cdiv(full, n_steps), 8)
    b_pad = tb * n_steps
    if b_pad != B:
        x = jnp.pad(x, ((0, b_pad - B), (0, 0)))

    out = pl.pallas_call(
        fnn_kernel,
        out_shape=jax.ShapeDtypeStruct((b_pad, out_size), x.dtype),
        grid=(n_steps,),
        in_specs=[
            # x tiled over batch; standard double-buffered pipeline overlaps
            # the next tile's DMA with compute.  (If profiling ever shows the
            # DMA exposed, add pipeline_mode=pl.Buffered(3) here.)
            pl.BlockSpec((tb, in_size), lambda i: (i, 0)),
            pl.BlockSpec((in_size, hidden), lambda i: (0, 0)),    # w1: VMEM-resident
            pl.BlockSpec((1, hidden), lambda i: (0, 0)),          # b1: VMEM-resident
            pl.BlockSpec((1, hidden), lambda i: (0, 0)),          # w2 row: VMEM-resident
            pl.BlockSpec(memory_space=pltpu.MemorySpace.SMEM),    # b2 scalar in SMEM
        ],
        out_specs=pl.BlockSpec((tb, out_size), lambda i: (i, 0)),
        compiler_params=pltpu.CompilerParams(
            dimension_semantics=("parallel",),        # both TCs on v7x
            vmem_limit_bytes=32 * 1024 * 1024,        # headroom vs v5e's 16 MiB default
        ),
    )(x, w1, b1, w2_row, b2)
    return out[:B]


def init_linear(key, fan_in, fan_out):
    """Mimic torch.nn.Linear default init: U(-1/sqrt(fan_in), 1/sqrt(fan_in))."""
    kw, kb = jax.random.split(key)
    bound = 1.0 / math.sqrt(fan_in)
    w = jax.random.uniform(kw, (fan_in, fan_out), jnp.float32, -bound, bound)  # [in, out]
    b = jax.random.uniform(kb, (1, fan_out), jnp.float32, -bound, bound)
    return w, b


if __name__ == "__main__":
    in_size, hidden1_size, out_size = 11, 200, 1

    key = jax.random.PRNGKey(0)
    kx, k1, k2 = jax.random.split(key, 3)

    w1, b1 = init_linear(k1, in_size, hidden1_size)   # [11, 200], [1, 200]
    w2, b2 = init_linear(k2, hidden1_size, out_size)  # [200, 1],  [1, 1]
    w2_row = w2.T                                     # [1, 200] row for the VPU path

    ok = True
    # 8: tile-aligned tiny batch; 37: exercises pad + slice; 2500: exercises
    # the multi-step grid (2 balanced tiles -> both v7x TensorCores).
    for batch in (8, 37, 2500):
        x = jax.random.normal(jax.random.fold_in(kx, batch), (batch, in_size), jnp.float32)
        out = jax.block_until_ready(fnn_forward(x, w1, b1, w2_row, b2))

        # Pure-JAX reference check.
        h_ref = x @ w1 + b1
        h_ref = jnp.where(h_ref >= 0, h_ref, 0.01 * h_ref)
        ref = h_ref @ w2 + b2
        ok &= out.shape == (batch, out_size)
        ok &= bool(jnp.allclose(out, ref, atol=1e-4, rtol=1e-4))

    assert ok
    print("KERNEL_OK")
</pallas_src>

<mosaic_0001>
module attributes {stable_mosaic.version = 11 : i64} {
  func.func @fnn_kernel(%arg0: i32, %arg1: memref<8x11xf32, #tpu.memory_space<vmem>>, %arg2: memref<11x200xf32, #tpu.memory_space<vmem>>, %arg3: memref<1x200xf32, #tpu.memory_space<vmem>>, %arg4: memref<1x200xf32, #tpu.memory_space<vmem>>, %arg5: memref<1x1xf32, #tpu.memory_space<smem>>, %arg6: memref<8x1xf32, #tpu.memory_space<vmem>>) attributes {dimension_semantics = [#tpu.dimension_semantics<parallel>], iteration_bounds = array<i64: 1>, scalar_prefetch = 0 : i64, scratch_operands = 0 : i64, tpu.core_type = #tpu.core_type<tc>, window_params = [{transform_indices = @transform_0, window_bounds = array<i64: 8, 11>}, {pipeline_mode = #tpu.pipeline_mode<synchronous>, transform_indices = @transform_1, window_bounds = array<i64: 11, 200>}, {pipeline_mode = #tpu.pipeline_mode<synchronous>, transform_indices = @transform_2, window_bounds = array<i64: 1, 200>}, {pipeline_mode = #tpu.pipeline_mode<synchronous>, transform_indices = @transform_3, window_bounds = array<i64: 1, 200>}, {transform_indices = @transform_4, window_bounds = array<i64: 1, 1>}, {transform_indices = @transform_5, window_bounds = array<i64: 8, 1>}]} {
    %c0 = arith.constant 0 : index
    %c0_0 = arith.constant 0 : index
    %0 = vector.load %arg1[%c0, %c0_0] : memref<8x11xf32, #tpu.memory_space<vmem>>, vector<8x11xf32>
    %c0_1 = arith.constant 0 : index
    %c0_2 = arith.constant 0 : index
    %1 = vector.load %arg2[%c0_1, %c0_2] : memref<11x200xf32, #tpu.memory_space<vmem>>, vector<11x200xf32>
    %cst = arith.constant dense<0.000000e+00> : vector<8x200xf32>
    %2 = tpu.matmul %0, %1, %cst {dimension_numbers = #tpu.dot_dimension_numbers<[1], [0], [0], [1], [0, 0, 1, 1], [], []>} : vector<8x11xf32>, vector<11x200xf32>, vector<8x200xf32> -> vector<8x200xf32>
    %c0_3 = arith.constant 0 : index
    %c0_4 = arith.constant 0 : index
    %3 = vector.load %arg3[%c0_3, %c0_4] : memref<1x200xf32, #tpu.memory_space<vmem>>, vector<1x200xf32>
    %4 = vector.broadcast %3 : vector<1x200xf32> to vector<8x200xf32>
    %5 = arith.addf %2, %4 : vector<8x200xf32>
    %cst_5 = arith.constant 0.00999999977 : f32
    %6 = vector.broadcast %cst_5 : f32 to vector<8x200xf32>
    %7 = arith.mulf %6, %5 : vector<8x200xf32>
    %8 = arith.maximumf %5, %7 : vector<8x200xf32>
    %c0_6 = arith.constant 0 : index
    %c0_7 = arith.constant 0 : index
    %9 = vector.load %arg4[%c0_6, %c0_7] : memref<1x200xf32, #tpu.memory_space<vmem>>, vector<1x200xf32>
    %10 = vector.broadcast %9 : vector<1x200xf32> to vector<8x200xf32>
    %11 = arith.mulf %8, %10 : vector<8x200xf32>
    %cst_8 = arith.constant dense<0.000000e+00> : vector<8xf32>
    %12 = vector.multi_reduction <add>, %11, %cst_8 [1] : vector<8x200xf32> to vector<8xf32>
    %13 = vector.shape_cast %12 : vector<8xf32> to vector<8x1xf32>
    %c0_9 = arith.constant 0 : index
    %c0_10 = arith.constant 0 : index
    %14 = memref.load %arg5[%c0_9, %c0_10] : memref<1x1xf32, #tpu.memory_space<smem>>
    %15 = vector.broadcast %14 : f32 to vector<8x1xf32>
    %16 = arith.addf %13, %15 : vector<8x1xf32>
    %c0_11 = arith.constant 0 : index
    %c0_12 = arith.constant 0 : index
    %17 = vector.load %arg6[%c0_11, %c0_12] : memref<8x1xf32, #tpu.memory_space<vmem>>, vector<8x1xf32>
    tpu.vector_store %arg6[%c0_11, %c0_12], %16 {strides = array<i32>} : memref<8x1xf32, #tpu.memory_space<vmem>>, vector<8x1xf32>,
    return
  }
  func.func @transform_0(%arg0: i32) -> (i32, i32) {
    %c0_i32 = arith.constant 0 : i32
    %c0_i32_0 = arith.constant 0 : i32
    return %arg0, %c0_i32 : i32, i32
  }
  func.func @transform_1(%arg0: i32) -> (i32, i32) {
    %c0_i32 = arith.constant 0 : i32
    %c0_i32_0 = arith.constant 0 : i32
    %c0_i32_1 = arith.constant 0 : i32
    return %c0_i32, %c0_i32_0 : i32, i32
  }
  func.func @transform_2(%arg0: i32) -> (i32, i32) {
    %c0_i32 = arith.constant 0 : i32
    %c0_i32_0 = arith.constant 0 : i32
    %c0_i32_1 = arith.constant 0 : i32
    return %c0_i32, %c0_i32_0 : i32, i32
  }
  func.func @transform_3(%arg0: i32) -> (i32, i32) {
    %c0_i32 = arith.constant 0 : i32
    %c0_i32_0 = arith.constant 0 : i32
    %c0_i32_1 = arith.constant 0 : i32
    return %c0_i32, %c0_i32_0 : i32, i32
  }
  func.func @transform_4(%arg0: i32) -> (i32, i32) {
    %c0_i32 = arith.constant 0 : i32
    %c0_i32_0 = arith.constant 0 : i32
    %c0_i32_1 = arith.constant 0 : i32
    return %c0_i32, %c0_i32_0 : i32, i32
  }
  func.func @transform_5(%arg0: i32) -> (i32, i32) {
    %c0_i32 = arith.constant 0 : i32
    %c0_i32_0 = arith.constant 0 : i32
    return %arg0, %c0_i32 : i32, i32
  }
}

</mosaic_0001>

<llo_original>
// kernel: tpu_custom_call.1
$region0: #{tpu_custom_call.1}
  #allocation0 [shape = 'u32[]', space=smem, size = 0x4, offset = 0x4, fixed_abs, tag = 'smem constant byte address 0x4 - core index']
  #allocation1 [shape = 'u32[144,128]{1,0:T(1,128)}', space=vmem, size = 0x12000, scoped, tag = 'internal scratch']
  #allocation2 [shape = 'f32[1,1]{1,0:T(1,128)S(6)}', space=smem, size = 0x200, scoped, tag = 'scoped memory for tpu_custom_call.1']
  %s0 = inlined_call_operand.hbm [shape: f32[8,11], index: 0, kind: input, shape index: {}]
  %s1 = inlined_call_operand.hbm [shape: f32[11,200], index: 1, kind: input, shape index: {}]
  %s2 = inlined_call_operand.vmem [shape: f32[1,200], index: 2, kind: input, shape index: {}]
  %s3 = inlined_call_operand.vmem [shape: f32[1,200], index: 3, kind: input, shape index: {}]
  %s4 = inlined_call_operand.<no memory space> [shape: f32[1,1], index: 4, kind: input, shape index: {}]
  %s5 = inlined_call_operand.vmem [shape: f32[8,1], index: 5, kind: output, shape index: {}]
  %s6 = sld [smem:[#allocation0]]
  $region38: #{tpu_custom_call.1} parent=0
    _
  %s8 = ssub.s32 1, %s6
  %s9 = scalar_select 0, %s8, %s6
  %10 = sst [smem:[#allocation2]] %s4
  $region1: #{tpu_custom_call.1} parent=0
    #allocation3 [shape = 'u8[4096]{0}', space=vmem, size = 0x1000, scoped, tag = 'input window, operand 0, single buffered']
    #allocation4 [shape = 's32[1]{0}', space=sflag, size = 0x4, scoped, tag = 'scoped memory for tpu_custom_call.1']
    #allocation5 [shape = 'u8[16384]{0}', space=vmem, size = 0x4000, scoped, tag = 'input window, operand 1, single buffered']
    #allocation6 [shape = 's32[1]{0}', space=sflag, size = 0x4, scoped, tag = 'scoped memory for tpu_custom_call.1']
    %11 = vsyncpa [#allocation4], 0
    %12 = vsyncpa [#allocation6], 0
    // Predicated region
    $region2: #{tpu_custom_call.1} parent=1 // pred_check
      _
    $region3: #{tpu_custom_call.1} parent=1 // pred_check_branch
      %14 = sbr.rel (0) target = $region5
    $region4: #{tpu_custom_call.1} parent=1 // pred_region
      %s16 = ssub.s32 128, 128
      %17 = vsyncadd [#allocation4], %s16
      %s19 = sshll.u32 [#allocation3], 4
      %s20 = int_to_ptr.vmem [resolvable:$true] %s19
      %22 = dma.hbm_to_vmem [thread:$0]  %s0, 128, %s20, [#allocation4]
    $region5: #{tpu_custom_call.1} parent=1 // pred_fallthru
      _
    // Predicated region
    $region6: #{tpu_custom_call.1} parent=1 // pred_check
      _
    $region7: #{tpu_custom_call.1} parent=1 // pred_check_branch
      %24 = sbr.rel (0) target = $region9
    $region8: #{tpu_custom_call.1} parent=1 // pred_region
      %s26 = ssub.s32 512, 512
      %27 = vsyncadd [#allocation6], %s26
      %s28 = sshll.u32 [#allocation5], 4
      %s29 = int_to_ptr.vmem [resolvable:$true] %s28
      %34 = dma.hbm_to_vmem [thread:$0]  %s1, 512, %s29, [#allocation6], 256, 256, 16
    $region9: #{tpu_custom_call.1} parent=1 // pred_fallthru
      _
    // Predicated region
    $region10: #{tpu_custom_call.1} parent=1 // pred_check
      _
    $region11: #{tpu_custom_call.1} parent=1 // pred_check_branch
      %36 = sbr.rel (0) target = $region13
    $region12: #{tpu_custom_call.1} parent=1 // pred_region
      _
    $region13: #{tpu_custom_call.1} parent=1 // pred_fallthru
      _
    // Predicated region
    $region14: #{tpu_custom_call.1} parent=1 // pred_check
      _
    $region15: #{tpu_custom_call.1} parent=1 // pred_check_branch
      %38 = sbr.rel (0) target = $region17
    $region16: #{tpu_custom_call.1} parent=1 // pred_region
      _
    $region17: #{tpu_custom_call.1} parent=1 // pred_fallthru
      _
    // Predicated region
    $region18: #{tpu_custom_call.1} parent=1 // pred_check
      _
    $region19: #{tpu_custom_call.1} parent=1 // pred_check_branch
      %40 = sbr.rel (0) target = $region21
    $region20: #{tpu_custom_call.1} parent=1 // pred_region
      _
    $region21: #{tpu_custom_call.1} parent=1 // pred_fallthru
      _
    // Predicated region
    $region22: #{tpu_custom_call.1} parent=1 // pred_check
      _
    $region23: #{tpu_custom_call.1} parent=1 // pred_check_branch
      %42 = sbr.rel (0) target = $region25
    $region24: #{tpu_custom_call.1} parent=1 // pred_region
      %43 = dma.done [#allocation4], 128
    $region25: #{tpu_custom_call.1} parent=1 // pred_fallthru
      _
    // Predicated region
    $region26: #{tpu_custom_call.1} parent=1 // pred_check
      _
    $region27: #{tpu_custom_call.1} parent=1 // pred_check_branch
      %45 = sbr.rel (0) target = $region29
    $region28: #{tpu_custom_call.1} parent=1 // pred_region
      %46 = dma.done [#allocation6], 512
    $region29: #{tpu_custom_call.1} parent=1 // pred_fallthru
      _
    %v47 = vld [vmem:[#allocation3] sm:$0xff]
    %v48 = vld [vmem:[#allocation5] sm:$0xff]
    %v49 = vld [vmem:[#allocation5 + $0x8] sm:$0xff]
    %v50 = vld [vmem:[#allocation5 + $0x10] sm:$0x7]
    %v51 = vld [vmem:[#allocation5 + $0x18] sm:$0x7]
    %v52 = vld [vmem:[%s2] sm:$0x3]
    %v54 = vlaneseq
    %v55 = vshrl.u32 %v54, 7
    %v56 = vsub.s32 0, %v55
    %v57 = vrot.slane %v52, %v56
    %v58 = vlaneseq
    %v59 = vshrl.u32 %v58, 7
    %v60 = vsub.s32 1, %v59
    %v61 = vrot.slane %v52, %v60
    %vm64 = vcmask 89088
    %v66 = vsel %vm64, %v47, 0
    %vm68 = vcmask 1042432
    %v70 = vsel %vm68, %v50, 0
    %v73 = vsel %vm68, %v51, 0
    %75 = vmatprep.subr.mxu0 %v49
    %76 = vmatpush1.msra.mxu0 %v48
    %77 = vmatprep.subr.mxu0 %v73
    %78 = vmatpush1.msra.mxu0 %v70
    %79 = vmatprep.subr.mxu0 0.0
    %80 = vmatpush1.msra.mxu0 0.0
    %81 = vmatprep.subr.mxu0 0.0
    %82 = vmatpush1.msra.mxu0 0.0
    %83 = vmatprep.subr.mxu0 0.0
    %84 = vmatpush1.msra.mxu0 0.0
    %85 = vmatprep.subr.mxu0 0.0
    %86 = vmatpush1.msra.mxu0 0.0
    %87 = vmatprep.subr.mxu0 0.0
    %88 = vmatpush1.msra.mxu0 0.0
    %89 = vmatprep.subr.mxu0 0.0
    %90 = vmatpush1.msra.mxu0 0.0
    %91 = vmatprep.subr.mxu0 0.0
    %92 = vmatpush1.msra.mxu0 0.0
    %93 = vmatprep.subr.mxu0 0.0
    %94 = vmatpush1.msra.mxu0 0.0
    %95 = vmatprep.subr.mxu0 0.0
    %96 = vmatpush1.msra.mxu0 0.0
    %97 = vmatprep.subr.mxu0 0.0
    %98 = vmatpush1.msra.mxu0 0.0
    %99 = vmatprep.subr.mxu0 0.0
    %100 = vmatpush1.msra.mxu0 0.0
    %101 = vmatprep.subr.mxu0 0.0
    %102 = vmatpush1.msra.mxu0 0.0
    %103 = vmatprep.subr.mxu0 0.0
    %104 = vmatpush1.msra.mxu0 0.0
    %105 = vmatprep.subr.mxu0 0.0
    %106 = vmatpush1.msra.mxu0 0.0
    %107 = vmatprep.subr.mxu0 0.0
    %108 = vmatpush1.msra.mxu0 0.0
    %109 = vmatprep.subr.mxu0 0.0
    %110 = vmatpush1.msra.mxu0 0.0
    %111 = vmatprep.subr.mxu0 0.0
    %112 = vmatpush1.msra.mxu0 0.0
    %113 = vmatprep.subr.mxu0 0.0
    %114 = vmatpush1.msra.mxu0 0.0
    %115 = vmatprep.subr.mxu0 0.0
    %116 = vmatpush1.msra.mxu0 0.0
    %117 = vmatprep.subr.mxu0 0.0
    %118 = vmatpush1.msra.mxu0 0.0
    %119 = vmatprep.subr.mxu0 0.0
    %120 = vmatpush1.msra.mxu0 0.0
    %121 = vmatprep.subr.mxu0 0.0
    %122 = vmatpush1.msra.mxu0 0.0
    %123 = vmatprep.subr.mxu0 0.0
    %124 = vmatpush1.msra.mxu0 0.0
    %125 = vmatprep.subr.mxu0 0.0
    %126 = vmatpush1.msra.mxu0 0.0
    %127 = vmatprep.subr.mxu0 0.0
    %128 = vmatpush1.msra.mxu0 0.0
    %129 = vmatprep.subr.mxu0 0.0
    %130 = vmatpush1.msra.mxu0 0.0
    %131 = vmatprep.subr.mxu0 0.0
    %132 = vmatpush1.msra.mxu0 0.0
    %133 = vmatprep.subr.mxu0 0.0
    %134 = vmatpush1.msra.mxu0 0.0
    %135 = vmatprep.subr.mxu0 0.0
    %136 = vmatpush1.msra.mxu0 0.0
    %137 = vmatprep.subr.mxu0 0.0
    %138 = vmatpush1.msra.mxu0 0.0
    %139 = vmatprep.mubr.f32.mxu0 0.0
    %140 = vmatmul.mubr.f32.gmra.mrb[0].mxu0 %v66
    %v141 = vpop.f32.mrb[0].mxu0
    %v142 = vadd.f32 %v57, %v141
    %v143 = vpop.f32.mrb[0].mxu0
    %v144 = vadd.f32 %v61, %v143
    %145 = vdwg.mxu0
    %v146 = vmul.f32 %v142, 0.01
    %v147 = vmul.f32 %v144, 0.01
    %v148 = vmax.f32 %v142, %v146
    %v149 = vmax.f32 %v144, %v147
    %v150 = vld [vmem:[%s3] sm:$0x3]
    %v152 = vlaneseq
    %v153 = vshrl.u32 %v152, 7
    %v154 = vsub.s32 0, %v153
    %v155 = vrot.slane %v150, %v154
    %v156 = vlaneseq
    %v157 = vshrl.u32 %v156, 7
    %v158 = vsub.s32 1, %v157
    %v159 = vrot.slane %v150, %v158
    %v162 = vmul.f32 %v148, %v155
    %v163 = vmul.f32 %v149, %v159
    %vm164 = vcmask 588800
    %v165 = vsel %vm164, %v163, 0.0
    %v166 = vadd.f32 %v162, %v165
    %167 = vadd.xlane.f32.xlu0 %v166
    %v168 = vpop.xlane.xlu0 %167
    %s169 = sld [smem:[#allocation2]]
    %v170 = vstv %s169
    %v171 = vadd.f32 %v168, %v170
    %vm172 = vcmask 7168
    %173 = vst.msk [vmem:[%s5] sm:$0xff] %vm172, %v171
    // Predicated region
    $region30: #{tpu_custom_call.1} parent=1 // pred_check
      _
    $region31: #{tpu_custom_call.1} parent=1 // pred_check_branch
      %175 = sbr.rel (0) target = $region33
    $region32: #{tpu_custom_call.1} parent=1 // pred_region
      _
    $region33: #{tpu_custom_call.1} parent=1 // pred_fallthru
      _
    // Predicated region
    $region34: #{tpu_custom_call.1} parent=1 // pred_check
      _
    $region35: #{tpu_custom_call.1} parent=1 // pred_check_branch
      %177 = sbr.rel (0) target = $region37
    $region36: #{tpu_custom_call.1} parent=1 // pred_region
      _
    $region37: #{tpu_custom_call.1} parent=1 // pred_fallthru
      _
    %178 = vsyncpa [#allocation4], 1
    %179 = vsyncpa [#allocation6], 1

</llo_original>
